<compile_context>
chip_gen: v7x
topology: tpu7x:2x2x1
jax: 0.10.0
libtpu: 0.0.40
codegen_flags: <defaults>
</compile_context>

<pallas_src>
import jax
import jax.numpy as jnp
from jax.experimental import pallas as pl
from jax.experimental.pallas import tpu as pltpu

LAYER_NUM = 2


def _make_cross_kernel(layer_num):
    def kernel(x_ref, kt_ref, b_ref, o_ref):
        # x_ref : (TBP, Fp)    packed rows (Fp = pack * F, lane-dense)
        # kt_ref: (L, Fp, Fp)  block-diagonal W^T per layer (resident)
        # b_ref : (L, 1, Fp)   tiled bias per layer (resident)
        x0 = x_ref[...]
        xl = x0
        for i in range(layer_num):  # layer_num is tiny & static -> unrolled
            # (W @ x_l) for each packed 32-lane segment == x_l @ blockdiag(W^T)
            xl_w = jnp.dot(xl, kt_ref[i], preferred_element_type=jnp.float32)
            xl = x0 * (xl_w + b_ref[i]) + xl
        o_ref[...] = xl.astype(o_ref.dtype)

    return kernel


def _round_up(n, m):
    return ((n + m - 1) // m) * m


def cross_forward(x, kernels, bias, *, block_packed_rows=4096):
    """x: (B, F) float32; kernels: (L, F, F); bias: (L, F, 1)."""
    B, F = x.shape
    L = kernels.shape[0]

    # ---- one-time (outside the grid loop) parameter / activation re-layouts
    pack = 128 // F if (F < 128 and 128 % F == 0) else 1
    Fp = pack * F

    kernels_t = jnp.swapaxes(kernels, 1, 2)          # (L, F, F) = W^T per layer
    bias_rows = bias.reshape(L, 1, F)                # (L, F, 1) -> (L, 1, F), no-copy
    if pack > 1:
        # Block-diagonal W^T: Wbd[p*F+f, q*F+k] = (p==q) * W^T[f, k]
        eye = jnp.eye(pack, dtype=kernels.dtype)
        kernels_t = jnp.einsum("pq,lfk->lpfqk", eye, kernels_t).reshape(L, Fp, Fp)
        bias_rows = jnp.tile(bias_rows, (1, 1, pack))  # (L, 1, Fp)

    # Pack `pack` consecutive batch rows into one 128-lane row.  Only pad the
    # (at most pack-1) rows needed for the reshape -- never to a tile multiple.
    Bp = _round_up(B, pack)
    x_in = x if Bp == B else jnp.pad(x, ((0, Bp - B), (0, 0)))
    P = Bp // pack
    x_packed = x_in.reshape(P, Fp)                   # contiguous reshape, free

    # ---- batch-tile size (packed rows)
    if P <= 8:
        tbp = P                                      # single full-array block
    else:
        tbp = max(8, min(_round_up(block_packed_rows, 8), _round_up(P, 8)))
        if tbp >= P:
            # Keep >= 2 grid steps so the "parallel" axis feeds both TCs on v7x.
            tbp = max(8, _round_up((P + 1) // 2, 8))

    grid = (pl.cdiv(P, tbp),)

    itemsize = jnp.dtype(x.dtype).itemsize
    cost = pl.CostEstimate(
        flops=2 * L * P * Fp * Fp,
        transcendentals=0,
        bytes_accessed=2 * P * Fp * itemsize + L * Fp * Fp * itemsize,
    )

    out_packed = pl.pallas_call(
        _make_cross_kernel(L),
        out_shape=jax.ShapeDtypeStruct((P, Fp), x.dtype),
        grid=grid,
        in_specs=[
            pl.BlockSpec((tbp, Fp), lambda i: (i, 0)),       # batch-tiled input
            pl.BlockSpec((L, Fp, Fp), lambda i: (0, 0, 0)),  # weights: resident
            pl.BlockSpec((L, 1, Fp), lambda i: (0, 0, 0)),   # bias:    resident
        ],
        out_specs=pl.BlockSpec((tbp, Fp), lambda i: (i, 0)),
        compiler_params=pltpu.CompilerParams(
            dimension_semantics=("parallel",),  # shard batch axis on v7x (2 TCs)
        ),
        cost_estimate=cost,
    )(x_packed, kernels_t, bias_rows)

    out = out_packed.reshape(Bp, F)                  # contiguous reshape, free
    return out if Bp == B else out[:B]


def cross_reference(x, kernels, bias):
    """Pure-JAX mirror of the PyTorch forward, for verification."""
    x0 = x[:, :, None]                               # (B, F, 1)
    xl = x0
    for i in range(kernels.shape[0]):
        xl_w = jnp.einsum("fk,bko->bfo", kernels[i], xl)  # kernels[i] @ x_l
        dot_ = xl_w + bias[i]                             # + (F, 1) bias
        xl = x0 * dot_ + xl
    return xl[:, :, 0]


if __name__ == "__main__":
    F = 32  # in_features

    key = jax.random.PRNGKey(0)
    kx, kw, kb, kx2 = jax.random.split(key, 4)

    # Xavier-normal weights (matching the module's init); nonzero bias so the
    # tiled-bias path is actually exercised (module inits bias to zeros, but
    # the forward pass is generic).
    xavier_std = (2.0 / (F + F)) ** 0.5
    kernels = jax.random.normal(kw, (LAYER_NUM, F, F), dtype=jnp.float32) * xavier_std
    bias = jax.random.normal(kb, (LAYER_NUM, F, 1), dtype=jnp.float32) * 0.1

    # Case 1: B not a multiple of the pack factor -> tiny pad, multi-step grid
    # with a ragged (masked) tail block.  Small block size forces >1 step.
    B1 = 102
    x1 = jax.random.normal(kx, (B1, F), dtype=jnp.float32)
    out1 = jax.block_until_ready(cross_forward(x1, kernels, bias, block_packed_rows=16))
    ref1 = cross_reference(x1, kernels, bias)
    assert out1.shape == (B1, F)
    assert jnp.allclose(out1, ref1, atol=1e-5, rtol=1e-5), "mismatch vs reference (case 1)"

    # Case 2: aligned batch, default tile sizing (no pad / no slice path).
    B2 = 64
    x2 = jax.random.normal(kx2, (B2, F), dtype=jnp.float32)
    out2 = jax.block_until_ready(cross_forward(x2, kernels, bias))
    ref2 = cross_reference(x2, kernels, bias)
    assert out2.shape == (B2, F)
    assert jnp.allclose(out2, ref2, atol=1e-5, rtol=1e-5), "mismatch vs reference (case 2)"

    print("KERNEL_OK")
</pallas_src>

<mosaic_0001>
module attributes {stable_mosaic.version = 11 : i64} {
  func.func @kernel(%arg0: i32, %arg1: memref<16x128xf32, #tpu.memory_space<vmem>>, %arg2: memref<2x128x128xf32, #tpu.memory_space<vmem>>, %arg3: memref<2x1x128xf32, #tpu.memory_space<vmem>>, %arg4: memref<16x128xf32, #tpu.memory_space<vmem>>) attributes {dimension_semantics = [#tpu.dimension_semantics<parallel>], iteration_bounds = array<i64: 2>, scalar_prefetch = 0 : i64, scratch_operands = 0 : i64, tpu.core_type = #tpu.core_type<tc>, window_params = [{transform_indices = @transform_0, window_bounds = array<i64: 16, 128>}, {pipeline_mode = #tpu.pipeline_mode<synchronous>, transform_indices = @transform_1, window_bounds = array<i64: 2, 128, 128>}, {pipeline_mode = #tpu.pipeline_mode<synchronous>, transform_indices = @transform_2, window_bounds = array<i64: 2, 1, 128>}, {transform_indices = @transform_3, window_bounds = array<i64: 16, 128>}]} {
    %c0 = arith.constant 0 : index
    %c0_0 = arith.constant 0 : index
    %0 = vector.load %arg1[%c0, %c0_0] : memref<16x128xf32, #tpu.memory_space<vmem>>, vector<16x128xf32>
    %c0_1 = arith.constant 0 : index
    %c0_2 = arith.constant 0 : index
    %c0_3 = arith.constant 0 : index
    %1 = vector.load %arg2[%c0_1, %c0_2, %c0_3] : memref<2x128x128xf32, #tpu.memory_space<vmem>>, vector<1x128x128xf32>
    %2 = vector.shape_cast %1 : vector<1x128x128xf32> to vector<128x128xf32>
    %cst = arith.constant dense<0.000000e+00> : vector<16x128xf32>
    %3 = tpu.matmul %0, %2, %cst {dimension_numbers = #tpu.dot_dimension_numbers<[1], [0], [0], [1], [0, 0, 1, 1], [], []>} : vector<16x128xf32>, vector<128x128xf32>, vector<16x128xf32> -> vector<16x128xf32>
    %c0_4 = arith.constant 0 : index
    %c0_5 = arith.constant 0 : index
    %c0_6 = arith.constant 0 : index
    %4 = vector.load %arg3[%c0_4, %c0_5, %c0_6] : memref<2x1x128xf32, #tpu.memory_space<vmem>>, vector<1x1x128xf32>
    %5 = vector.shape_cast %4 : vector<1x1x128xf32> to vector<1x128xf32>
    %6 = vector.broadcast %5 : vector<1x128xf32> to vector<16x128xf32>
    %7 = arith.addf %3, %6 : vector<16x128xf32>
    %8 = arith.mulf %0, %7 : vector<16x128xf32>
    %9 = arith.addf %8, %0 : vector<16x128xf32>
    %c1 = arith.constant 1 : index
    %c0_7 = arith.constant 0 : index
    %c0_8 = arith.constant 0 : index
    %10 = vector.load %arg2[%c1, %c0_7, %c0_8] : memref<2x128x128xf32, #tpu.memory_space<vmem>>, vector<1x128x128xf32>
    %11 = vector.shape_cast %10 : vector<1x128x128xf32> to vector<128x128xf32>
    %cst_9 = arith.constant dense<0.000000e+00> : vector<16x128xf32>
    %12 = tpu.matmul %9, %11, %cst_9 {dimension_numbers = #tpu.dot_dimension_numbers<[1], [0], [0], [1], [0, 0, 1, 1], [], []>} : vector<16x128xf32>, vector<128x128xf32>, vector<16x128xf32> -> vector<16x128xf32>
    %c1_10 = arith.constant 1 : index
    %c0_11 = arith.constant 0 : index
    %c0_12 = arith.constant 0 : index
    %13 = vector.load %arg3[%c1_10, %c0_11, %c0_12] : memref<2x1x128xf32, #tpu.memory_space<vmem>>, vector<1x1x128xf32>
    %14 = vector.shape_cast %13 : vector<1x1x128xf32> to vector<1x128xf32>
    %15 = vector.broadcast %14 : vector<1x128xf32> to vector<16x128xf32>
    %16 = arith.addf %12, %15 : vector<16x128xf32>
    %17 = arith.mulf %0, %16 : vector<16x128xf32>
    %18 = arith.addf %17, %9 : vector<16x128xf32>
    %c0_13 = arith.constant 0 : index
    %c0_14 = arith.constant 0 : index
    %19 = vector.load %arg4[%c0_13, %c0_14] : memref<16x128xf32, #tpu.memory_space<vmem>>, vector<16x128xf32>
    tpu.vector_store %arg4[%c0_13, %c0_14], %18 {strides = array<i32>} : memref<16x128xf32, #tpu.memory_space<vmem>>, vector<16x128xf32>,
    return
  }
  func.func @transform_0(%arg0: i32) -> (i32, i32) {
    %c0_i32 = arith.constant 0 : i32
    %c0_i32_0 = arith.constant 0 : i32
    return %arg0, %c0_i32 : i32, i32
  }
  func.func @transform_1(%arg0: i32) -> (i32, i32, i32) {
    %c0_i32 = arith.constant 0 : i32
    %c0_i32_0 = arith.constant 0 : i32
    %c0_i32_1 = arith.constant 0 : i32
    %c0_i32_2 = arith.constant 0 : i32
    return %c0_i32, %c0_i32_0, %c0_i32_1 : i32, i32, i32
  }
  func.func @transform_2(%arg0: i32) -> (i32, i32, i32) {
    %c0_i32 = arith.constant 0 : i32
    %c0_i32_0 = arith.constant 0 : i32
    %c0_i32_1 = arith.constant 0 : i32
    %c0_i32_2 = arith.constant 0 : i32
    return %c0_i32, %c0_i32_0, %c0_i32_1 : i32, i32, i32
  }
  func.func @transform_3(%arg0: i32) -> (i32, i32) {
    %c0_i32 = arith.constant 0 : i32
    %c0_i32_0 = arith.constant 0 : i32
    return %arg0, %c0_i32 : i32, i32
  }
}

</mosaic_0001>

<llo_original>
// kernel: tpu_custom_call.1
$region0: #{tpu_custom_call.1}
  #allocation0 [shape = 'u32[]', space=smem, size = 0x4, offset = 0x4, fixed_abs, tag = 'smem constant byte address 0x4 - core index']
  #allocation1 [shape = 'u32[144,128]{1,0:T(1,128)}', space=vmem, size = 0x12000, scoped, tag = 'internal scratch']
  %s0 = inlined_call_operand.hbm [shape: f32[26,128], index: 0, kind: input, shape index: {}]
  %s1 = inlined_call_operand.hbm [shape: f32[2,128,128], index: 1, kind: input, shape index: {}]
  %s2 = inlined_call_operand.vmem [shape: f32[2,1,128], index: 2, kind: input, shape index: {}]
  %s3 = inlined_call_operand.hbm [shape: f32[26,128], index: 3, kind: output, shape index: {}]
  %s4 = sld [smem:[#allocation0]]
  $region53: #{tpu_custom_call.1} parent=0
    _
  %s6 = ssub.s32 1, %s4
  %s7 = scalar_select 0, %s6, %s4
  $region1: #{tpu_custom_call.1} parent=0
    #allocation2 [shape = 'u8[16384]{0}', space=vmem, size = 0x4000, scoped, tag = 'input window, operand 0']
    #allocation3 [shape = 's32[2]{0}', space=sflag, size = 0x8, scoped, tag = 'scoped memory for tpu_custom_call.1']
    #allocation4 [shape = 's32[2]{0}', space=sflag, size = 0x8, scoped, tag = 'scoped memory for tpu_custom_call.1']
    #allocation5 [shape = 'u8[131072]{0}', space=vmem, size = 0x20000, scoped, tag = 'input window, operand 1, single buffered']
    #allocation6 [shape = 's32[1]{0}', space=sflag, size = 0x4, scoped, tag = 'scoped memory for tpu_custom_call.1']
    #allocation7 [shape = 'u8[16384]{0}', space=vmem, size = 0x4000, scoped, tag = 'output window, operand 0']
    %8 = vsyncpa [#allocation3], 0
    %s9 = scalar_lea.sflag [#allocation3], 1
    %10 = vsyncpa %s9, 0
    %11 = vsyncpa [#allocation6], 0
    %12 = vsyncpa [#allocation4], 0
    %s13 = scalar_lea.sflag [#allocation4], 1
    %14 = vsyncpa %s13, 0
    loop: start=0, step=1, limit=4
    $region2: #{tpu_custom_call.1} parent=1 // loop_pre_header
      _
    $region3: #{tpu_custom_call.1} parent=1 // loop_header
      %s16 = sphi 0, %s20
      %p17 = scmp.ge.s32.totalorder %s16, 4
      %s26 = sphi 0, %s28
      %s29 = sphi 0, %s26
      %s30 = sphi 0, %s29
      %s46 = sphi 0, %s30
      %s50 = sphi 0, %s50
      %s52 = sphi 0, %s50
      %s53 = sphi 0, %s52
      %s67 = sphi 0, %s53
      %s71 = sphi 0, %s71
      %s73 = sphi 0, %s71
      %s74 = sphi 0, %s73
      %s88 = sphi 0, %s74
      %s94 = sphi 0, %s96
      %s97 = sphi 0, %s94
      %s98 = sphi 0, %s97
      %s114 = sphi 0, %s98
    $region4: #{tpu_custom_call.1} parent=1 // loop_header_branch
      %19 = sbr.rel (%p17) target = $region8
    $region5: #{tpu_custom_call.1} parent=1 // loop_body
      %s21 = ssub.s32 %s16, 1
      %s22 = ssub.s32 %s16, 2
      %s23 = sadd.s32 %s16, 1
      %s24 = ssub.s32 %s16, %s23
      %p25 = scmp.eq.s32.totalorder %s24, 0
      %s27 = sadd.s32 %s26, 1
      %s28 = scalar_select %p25, %s26, %s27
      %p31 = pneg %p25
      %p32 = scmp.eq.s32.totalorder %s16, 1
      %p33 = por %p31, %p32
      %p34 = scmp.ne.s32.totalorder %s26, %s29
      %p35 = scmp.eq.s32.totalorder %s16, 0
      %p36 = por %p34, %p35
      %p37 = scmp.ne.s32.totalorder %s26, %s29
      %p38 = scmp.eq.s32.totalorder %s21, 1
      %p39 = por %p37, %p38
      %p40 = scmp.ne.s32.totalorder %s29, %s30
      %p41 = scmp.eq.s32.totalorder %s21, 0
      %p42 = por %p40, %p41
      %p43 = scmp.ne.s32.totalorder %s29, %s30
      %p44 = scmp.eq.s32.totalorder %s22, 1
      %p45 = por %p43, %p44
      %p47 = scmp.ne.s32.totalorder %s30, %s46
      %p48 = scmp.eq.s32.totalorder %s22, 0
      %p49 = por %p47, %p48
      %s51 = sadd.s32 %s50, 1
      %p54 = scmp.eq.s32.totalorder %s16, 1
      %p55 = scmp.ne.s32.totalorder %s50, %s52
      %p56 = scmp.eq.s32.totalorder %s16, 0
      %p57 = por %p55, %p56
      %p58 = scmp.ne.s32.totalorder %s50, %s52
      %p59 = scmp.eq.s32.totalorder %s21, 1
      %p60 = por %p58, %p59
      %p61 = scmp.ne.s32.totalorder %s52, %s53
      %p62 = scmp.eq.s32.totalorder %s21, 0
      %p63 = por %p61, %p62
      %p64 = scmp.ne.s32.totalorder %s52, %s53
      %p65 = scmp.eq.s32.totalorder %s22, 1
      %p66 = por %p64, %p65
      %p68 = scmp.ne.s32.totalorder %s53, %s67
      %p69 = scmp.eq.s32.totalorder %s22, 0
      %p70 = por %p68, %p69
      %s72 = sadd.s32 %s71, 1
      %p75 = scmp.eq.s32.totalorder %s16, 1
      %p76 = scmp.ne.s32.totalorder %s71, %s73
      %p77 = scmp.eq.s32.totalorder %s16, 0
      %p78 = por %p76, %p77
      %p79 = scmp.ne.s32.totalorder %s71, %s73
      %p80 = scmp.eq.s32.totalorder %s21, 1
      %p81 = por %p79, %p80
      %p82 = scmp.ne.s32.totalorder %s73, %s74
      %p83 = scmp.eq.s32.totalorder %s21, 0
      %p84 = por %p82, %p83
      %p85 = scmp.ne.s32.totalorder %s73, %s74
      %p86 = scmp.eq.s32.totalorder %s22, 1
      %p87 = por %p85, %p86
      %p89 = scmp.ne.s32.totalorder %s74, %s88
      %p90 = scmp.eq.s32.totalorder %s22, 0
      %p91 = por %p89, %p90
      %s92 = ssub.s32 %s16, %s23
      %p93 = scmp.eq.s32.totalorder %s92, 0
      %s95 = sadd.s32 %s94, 1
      %s96 = scalar_select %p93, %s94, %s95
      %p99 = pneg %p93
      %p100 = scmp.eq.s32.totalorder %s16, 1
      %p101 = por %p99, %p100
      %p102 = scmp.ne.s32.totalorder %s94, %s97
      %p103 = scmp.eq.s32.totalorder %s16, 0
      %p104 = por %p102, %p103
      %p105 = scmp.ne.s32.totalorder %s94, %s97
      %p106 = scmp.eq.s32.totalorder %s21, 1
      %p107 = por %p105, %p106
      %p108 = scmp.ne.s32.totalorder %s97, %s98
      %p109 = scmp.eq.s32.totalorder %s21, 0
      %p110 = por %p108, %p109
      %p111 = scmp.ne.s32.totalorder %s97, %s98
      %p112 = scmp.eq.s32.totalorder %s22, 1
      %p113 = por %p111, %p112
      %p115 = scmp.ne.s32.totalorder %s98, %s114
      %p116 = scmp.eq.s32.totalorder %s22, 0
      %p117 = por %p115, %p116
      %p118 = scmp.le.s32.totalorder 1, %s16
      %p119 = scmp.lt.s32.totalorder %s16, 3
      %p120 = pnand %p118, %p119
      %p121 = pneg %p120
      // Predicated region
      $region9: #{tpu_custom_call.1} parent=5 // pred_check
        _
      $region10: #{tpu_custom_call.1} parent=5 // pred_check_branch
        %123 = sbr.rel (%p120) target = $region12
      $region11: #{tpu_custom_call.1} parent=5 // pred_region
        %s124 = ssub.s32 %s16, 1
        // Predicated region
        $region13: #{tpu_custom_call.1} parent=11 // pred_check
          %p125 = pneg %p63
        $region14: #{tpu_custom_call.1} parent=11 // pred_check_branch
          %127 = sbr.rel (%p125) target = $region16
        $region15: #{tpu_custom_call.1} parent=11 // pred_region
          %s129 = ssub.s32 4096, 4096
          %130 = vsyncadd [#allocation6], %s129
          %s131 = sshll.u32 [#allocation5], 4
          %s132 = int_to_ptr.vmem [resolvable:$true] %s131
          %137 = dma.hbm_to_vmem [thread:$0]  %s1, 4096, %s132, [#allocation6], 128, 128, 8
        $region16: #{tpu_custom_call.1} parent=11 // pred_fallthru
          _
        // Predicated region
        $region17: #{tpu_custom_call.1} parent=11 // pred_check
          %p138 = pneg %p84
        $region18: #{tpu_custom_call.1} parent=11 // pred_check_branch
          %140 = sbr.rel (%p138) target = $region20
        $region19: #{tpu_custom_call.1} parent=11 // pred_region
          _
        $region20: #{tpu_custom_call.1} parent=11 // pred_fallthru
          _
      $region12: #{tpu_custom_call.1} parent=5 // pred_fallthru
        _
      %p141 = scmp.lt.s32.totalorder %s16, 2
      // Predicated region
      $region21: #{tpu_custom_call.1} parent=5 // pred_check
        %p142 = pneg %p141
      $region22: #{tpu_custom_call.1} parent=5 // pred_check_branch
        %144 = sbr.rel (%p142) target = $region24
      $region23: #{tpu_custom_call.1} parent=5 // pred_region
        // Predicated region
        $region25: #{tpu_custom_call.1} parent=23 // pred_check
          %p145 = pneg %p36
        $region26: #{tpu_custom_call.1} parent=23 // pred_check_branch
          %147 = sbr.rel (%p145) target = $region28
        $region27: #{tpu_custom_call.1} parent=23 // pred_region
          %s148 = sand.u32 %s26, 1
          %s149 = scalar_lea.sflag [#allocation3], %s148
          %s150 = sand.u32 %s26, 1
          %s151 = smul.addr %s150, 16
          %s152 = scalar_lea.vmem [#allocation2], %s151
          %s153 = smul.u32 2, %s16
          %s155 = ssub.s32 256, 256
          %156 = vsyncadd %s149, %s155
          %s157 = smul.addr %s153, 128
          %s158 = scalar_lea.hbm %s0, %s157
          %s159 = sshll.u32 %s152, 4
          %s160 = int_to_ptr.vmem [resolvable:$true] %s159
          %165 = dma.hbm_to_vmem [thread:$0]  %s158, 256, %s160, %s149, 128, 128, 8
        $region28: #{tpu_custom_call.1} parent=23 // pred_fallthru
          _
      $region24: #{tpu_custom_call.1} parent=5 // pred_fallthru
        _
      %p166 = scmp.le.s32.totalorder 1, %s16
      %p167 = scmp.lt.s32.totalorder %s16, 3
      %p168 = pnand %p166, %p167
      %p169 = pneg %p168
      // Predicated region
      $region29: #{tpu_custom_call.1} parent=5 // pred_check
        _
      $region30: #{tpu_custom_call.1} parent=5 // pred_check_branch
        %171 = sbr.rel (%p168) target = $region32
      $region31: #{tpu_custom_call.1} parent=5 // pred_region
        %s172 = ssub.s32 %s16, 1
        %s173 = sand.u32 %s29, 1
        %s174 = scalar_lea.sflag [#allocation3], %s173
        %s175 = sand.u32 %s29, 1
        %s176 = smul.addr %s175, 16
        %s177 = scalar_lea.vmem [#allocation2], %s176
        // Predicated region
        $region33: #{tpu_custom_call.1} parent=31 // pred_check
          %p178 = pneg %p42
        $region34: #{tpu_custom_call.1} parent=31 // pred_check_branch
          %180 = sbr.rel (%p178) target = $region36
        $region35: #{tpu_custom_call.1} parent=31 // pred_region
          %181 = dma.done %s174, 256
        $region36: #{tpu_custom_call.1} parent=31 // pred_fallthru
          _
        // Predicated region
        $region37: #{tpu_custom_call.1} parent=31 // pred_check
          %p182 = pneg %p63
        $region38: #{tpu_custom_call.1} parent=31 // pred_check_branch
          %184 = sbr.rel (%p182) target = $region40
        $region39: #{tpu_custom_call.1} parent=31 // pred_region
          %185 = dma.done [#allocation6], 4096
        $region40: #{tpu_custom_call.1} parent=31 // pred_fallthru
          _
        %s186 = sand.u32 %s29, 1
        %s187 = scalar_lea.sflag [#allocation3], %s186
        %s188 = sand.u32 %s29, 1
        %s189 = smul.addr %s188, 16
        %s190 = scalar_lea.vmem [#allocation2], %s189
        %p191 = pneg %p42
        %p192 = pneg %p39
        %p193 = pneg %p63
        %p194 = pneg %p60
        %p195 = pneg %p84
        %p196 = pneg %p81
        %p197 = pneg %p110
        %p198 = pneg %p107
        %s199 = sand.u32 %s97, 1
        %s200 = scalar_lea.sflag [#allocation4], %s199
        %s201 = sand.u32 %s97, 1
        %s202 = smul.addr %s201, 16
        %s203 = scalar_lea.vmem [#allocation7], %s202
        %s204 = smul.u32 2, %s21
        %s205 = smul.u32 2, %s21
        %v206 = vld [vmem:[%s177] sm:$0xff]
        %v207 = vld [vmem:[%s177 + $0x8] sm:$0xff]
        %v208 = vld [vmem:[#allocation5] sm:$0xff]
        %v209 = vld [vmem:[#allocation5 + $0x8] sm:$0xff]
        %v210 = vld [vmem:[#allocation5 + $0x10] sm:$0xff]
        %v211 = vld [vmem:[#allocation5 + $0x18] sm:$0xff]
        %v212 = vld [vmem:[#allocation5 + $0x20] sm:$0xff]
        %v213 = vld [vmem:[#allocation5 + $0x28] sm:$0xff]
        %v214 = vld [vmem:[#allocation5 + $0x30] sm:$0xff]
        %v215 = vld [vmem:[#allocation5 + $0x38] sm:$0xff]
        %v216 = vld [vmem:[#allocation5 + $0x40] sm:$0xff]
        %v217 = vld [vmem:[#allocation5 + $0x48] sm:$0xff]
        %v218 = vld [vmem:[#allocation5 + $0x50] sm:$0xff]
        %v219 = vld [vmem:[#allocation5 + $0x58] sm:$0xff]
        %v220 = vld [vmem:[#allocation5 + $0x60] sm:$0xff]
        %v221 = vld [vmem:[#allocation5 + $0x68] sm:$0xff]
        %v222 = vld [vmem:[#allocation5 + $0x70] sm:$0xff]
        %v223 = vld [vmem:[#allocation5 + $0x78] sm:$0xff]
        %v224 = vld [vmem:[%s2] sm:$0x1]
        %v226 = vlaneseq
        %v227 = vshrl.u32 %v226, 7
        %v228 = vsub.s32 0, %v227
        %v229 = vrot.slane %v224, %v228
        %231 = vmatprep.subr.mxu0 0.0
        %232 = vmatpush1.msra.mxu0 %v208
        %233 = vmatprep.subr.mxu0 0.0
        %234 = vmatpush1.msra.mxu0 %v209
        %235 = vmatprep.subr.mxu0 0.0
        %236 = vmatpush1.msra.mxu0 %v210
        %237 = vmatprep.subr.mxu0 0.0
        %238 = vmatpush1.msra.mxu0 %v211
        %239 = vmatprep.subr.mxu0 0.0
        %240 = vmatpush1.msra.mxu0 %v212
        %241 = vmatprep.subr.mxu0 0.0
        %242 = vmatpush1.msra.mxu0 %v213
        %243 = vmatprep.subr.mxu0 0.0
        %244 = vmatpush1.msra.mxu0 %v214
        %245 = vmatprep.subr.mxu0 0.0
        %246 = vmatpush1.msra.mxu0 %v215
        %247 = vmatprep.subr.mxu0 0.0
        %248 = vmatpush1.msra.mxu0 %v216
        %249 = vmatprep.subr.mxu0 0.0
        %250 = vmatpush1.msra.mxu0 %v217
        %251 = vmatprep.subr.mxu0 0.0
        %252 = vmatpush1.msra.mxu0 %v218
        %253 = vmatprep.subr.mxu0 0.0
        %254 = vmatpush1.msra.mxu0 %v219
        %255 = vmatprep.subr.mxu0 0.0
        %256 = vmatpush1.msra.mxu0 %v220
        %257 = vmatprep.subr.mxu0 0.0
        %258 = vmatpush1.msra.mxu0 %v221
        %259 = vmatprep.subr.mxu0 0.0
        %260 = vmatpush1.msra.mxu0 %v222
        %261 = vmatprep.subr.mxu0 0.0
        %262 = vmatpush1.msra.mxu0 %v223
        %263 = vmatprep.subr.mxu0 0.0
        %264 = vmatpush1.msra.mxu0 0.0
        %265 = vmatprep.subr.mxu0 0.0
        %266 = vmatpush1.msra.mxu0 0.0
        %267 = vmatprep.subr.mxu0 0.0
        %268 = vmatpush1.msra.mxu0 0.0
        %269 = vmatprep.subr.mxu0 0.0
        %270 = vmatpush1.msra.mxu0 0.0
        %271 = vmatprep.subr.mxu0 0.0
        %272 = vmatpush1.msra.mxu0 0.0
        %273 = vmatprep.subr.mxu0 0.0
        %274 = vmatpush1.msra.mxu0 0.0
        %275 = vmatprep.subr.mxu0 0.0
        %276 = vmatpush1.msra.mxu0 0.0
        %277 = vmatprep.subr.mxu0 0.0
        %278 = vmatpush1.msra.mxu0 0.0
        %279 = vmatprep.subr.mxu0 0.0
        %280 = vmatpush1.msra.mxu0 0.0
        %281 = vmatprep.subr.mxu0 0.0
        %282 = vmatpush1.msra.mxu0 0.0
        %283 = vmatprep.subr.mxu0 0.0
        %284 = vmatpush1.msra.mxu0 0.0
        %285 = vmatprep.subr.mxu0 0.0
        %286 = vmatpush1.msra.mxu0 0.0
        %287 = vmatprep.subr.mxu0 0.0
        %288 = vmatpush1.msra.mxu0 0.0
        %289 = vmatprep.subr.mxu0 0.0
        %290 = vmatpush1.msra.mxu0 0.0
        %291 = vmatprep.subr.mxu0 0.0
        %292 = vmatpush1.msra.mxu0 0.0
        %293 = vmatprep.subr.mxu0 0.0
        %294 = vmatpush1.msra.mxu0 0.0
        %295 = vmatprep.mubr.f32.mxu0 0.0
        %296 = vmatmul.mubr.f32.gmra.mrb[0].mxu0 %v206
        %v297 = vpop.f32.mrb[0].mxu0
        %v298 = vadd.f32 %v229, %v297
        %v299 = vpop.f32.mrb[0].mxu0
        %300 = vmatprep.mubr.f32.mxu0 0.0
        %301 = vmatmul.mubr.f32.gmra.mrb[0].mxu0 %v207
        %v302 = vpop.f32.mrb[0].mxu0
        %v303 = vadd.f32 %v229, %v302
        %v304 = vpop.f32.mrb[0].mxu0
        %305 = vdwg.mxu0
        %v306 = vmul.f32 %v206, %v298
        %v307 = vmul.f32 %v207, %v303
        %v308 = vadd.f32 %v306, %v206
        %v309 = vadd.f32 %v307, %v207
        %s310 = scalar_lea.vmem [#allocation5], 128
        %v311 = vld [vmem:[%s310] sm:$0xff]
        %v312 = vld [vmem:[%s310 + $0x8] sm:$0xff]
        %v313 = vld [vmem:[%s310 + $0x10] sm:$0xff]
        %v314 = vld [vmem:[%s310 + $0x18] sm:$0xff]
        %v315 = vld [vmem:[%s310 + $0x20] sm:$0xff]
        %v316 = vld [vmem:[%s310 + $0x28] sm:$0xff]
        %v317 = vld [vmem:[%s310 + $0x30] sm:$0xff]
        %v318 = vld [vmem:[%s310 + $0x38] sm:$0xff]
        %v319 = vld [vmem:[%s310 + $0x40] sm:$0xff]
        %v320 = vld [vmem:[%s310 + $0x48] sm:$0xff]
        %v321 = vld [vmem:[%s310 + $0x50] sm:$0xff]
        %v322 = vld [vmem:[%s310 + $0x58] sm:$0xff]
        %v323 = vld [vmem:[%s310 + $0x60] sm:$0xff]
        %v324 = vld [vmem:[%s310 + $0x68] sm:$0xff]
        %v325 = vld [vmem:[%s310 + $0x70] sm:$0xff]
        %v326 = vld [vmem:[%s310 + $0x78] sm:$0xff]
        %s327 = scalar_lea.vmem %s2, 1
        %v328 = vld [vmem:[%s327] sm:$0x1]
        %v330 = vlaneseq
        %v331 = vshrl.u32 %v330, 7
        %v332 = vsub.s32 0, %v331
        %v333 = vrot.slane %v328, %v332
        %335 = vmatprep.subr.mxu0 0.0
        %336 = vmatpush1.msra.mxu0 %v311
        %337 = vmatprep.subr.mxu0 0.0
        %338 = vmatpush1.msra.mxu0 %v312
        %339 = vmatprep.subr.mxu0 0.0
        %340 = vmatpush1.msra.mxu0 %v313
        %341 = vmatprep.subr.mxu0 0.0
        %342 = vmatpush1.msra.mxu0 %v314
        %343 = vmatprep.subr.mxu0 0.0
        %344 = vmatpush1.msra.mxu0 %v315
        %345 = vmatprep.subr.mxu0 0.0
        %346 = vmatpush1.msra.mxu0 %v316
        %347 = vmatprep.subr.mxu0 0.0
        %348 = vmatpush1.msra.mxu0 %v317
        %349 = vmatprep.subr.mxu0 0.0
        %350 = vmatpush1.msra.mxu0 %v318
        %351 = vmatprep.subr.mxu0 0.0
        %352 = vmatpush1.msra.mxu0 %v319
        %353 = vmatprep.subr.mxu0 0.0
        %354 = vmatpush1.msra.mxu0 %v320
        %355 = vmatprep.subr.mxu0 0.0
        %356 = vmatpush1.msra.mxu0 %v321
        %357 = vmatprep.subr.mxu0 0.0
        %358 = vmatpush1.msra.mxu0 %v322
        %359 = vmatprep.subr.mxu0 0.0
        %360 = vmatpush1.msra.mxu0 %v323
        %361 = vmatprep.subr.mxu0 0.0
        %362 = vmatpush1.msra.mxu0 %v324
        %363 = vmatprep.subr.mxu0 0.0
        %364 = vmatpush1.msra.mxu0 %v325
        %365 = vmatprep.subr.mxu0 0.0
        %366 = vmatpush1.msra.mxu0 %v326
        %367 = vmatprep.subr.mxu0 0.0
        %368 = vmatpush1.msra.mxu0 0.0
        %369 = vmatprep.subr.mxu0 0.0
        %370 = vmatpush1.msra.mxu0 0.0
        %371 = vmatprep.subr.mxu0 0.0
        %372 = vmatpush1.msra.mxu0 0.0
        %373 = vmatprep.subr.mxu0 0.0
        %374 = vmatpush1.msra.mxu0 0.0
        %375 = vmatprep.subr.mxu0 0.0
        %376 = vmatpush1.msra.mxu0 0.0
        %377 = vmatprep.subr.mxu0 0.0
        %378 = vmatpush1.msra.mxu0 0.0
        %379 = vmatprep.subr.mxu0 0.0
        %380 = vmatpush1.msra.mxu0 0.0
        %381 = vmatprep.subr.mxu0 0.0
        %382 = vmatpush1.msra.mxu0 0.0
        %383 = vmatprep.subr.mxu0 0.0
        %384 = vmatpush1.msra.mxu0 0.0
        %385 = vmatprep.subr.mxu0 0.0
        %386 = vmatpush1.msra.mxu0 0.0
        %387 = vmatprep.subr.mxu0 0.0
        %388 = vmatpush1.msra.mxu0 0.0
        %389 = vmatprep.subr.mxu0 0.0
        %390 = vmatpush1.msra.mxu0 0.0
        %391 = vmatprep.subr.mxu0 0.0
        %392 = vmatpush1.msra.mxu0 0.0
        %393 = vmatprep.subr.mxu0 0.0
        %394 = vmatpush1.msra.mxu0 0.0
        %395 = vmatprep.subr.mxu0 0.0
        %396 = vmatpush1.msra.mxu0 0.0
        %397 = vmatprep.subr.mxu0 0.0
        %398 = vmatpush1.msra.mxu0 0.0
        %399 = vmatprep.mubr.f32.mxu0 0.0
        %400 = vmatmul.mubr.f32.gmra.mrb[0].mxu0 %v308
        %v401 = vpop.f32.mrb[0].mxu0
        %v402 = vadd.f32 %v333, %v401
        %v403 = vpop.f32.mrb[0].mxu0
        %404 = vmatprep.mubr.f32.mxu0 0.0
        %405 = vmatmul.mubr.f32.gmra.mrb[0].mxu0 %v309
        %v406 = vpop.f32.mrb[0].mxu0
        %v407 = vadd.f32 %v333, %v406
        %v408 = vpop.f32.mrb[0].mxu0
        %409 = vdwg.mxu0
        %v410 = vmul.f32 %v206, %v402
        %v411 = vmul.f32 %v207, %v407
        %v412 = vadd.f32 %v410, %v308
        %v413 = vadd.f32 %v411, %v309
        %414 = vst [vmem:[%s203] sm:$0xff] %v412
        %415 = vst [vmem:[%s203 + $0x8] sm:$0xff] %v413
        %s416 = sand.u32 %s97, 1
        %s417 = scalar_lea.sflag [#allocation4], %s416
        %s418 = sand.u32 %s97, 1
        %s419 = smul.addr %s418, 16
        %s420 = scalar_lea.vmem [#allocation7], %s419
        // Predicated region
        $region41: #{tpu_custom_call.1} parent=31 // pred_check
          %p421 = pneg %p107
        $region42: #{tpu_custom_call.1} parent=31 // pred_check_branch
          %423 = sbr.rel (%p421) target = $region44
        $region43: #{tpu_custom_call.1} parent=31 // pred_region
          %s424 = smul.u32 2, %s21
          %s426 = ssub.s32 256, 256
          %427 = vsyncadd %s417, %s426
          %s428 = smul.addr %s424, 128
          %s429 = scalar_lea.hbm %s3, %s428
          %s430 = sshll.u32 %s420, 4
          %s431 = int_to_ptr.vmem [resolvable:$true] %s430
          %436 = dma.vmem_to_hbm [thread:$0]  %s431, 256, %s429, %s417, 128, 128, 8
        $region44: #{tpu_custom_call.1} parent=31 // pred_fallthru
          _
      $region32: #{tpu_custom_call.1} parent=5 // pred_fallthru
        _
      %p437 = scmp.le.s32.totalorder 2, %s16
      // Predicated region
      $region45: #{tpu_custom_call.1} parent=5 // pred_check
        %p438 = pneg %p437
      $region46: #{tpu_custom_call.1} parent=5 // pred_check_branch
        %440 = sbr.rel (%p438) target = $region48
      $region47: #{tpu_custom_call.1} parent=5 // pred_region
        %s441 = ssub.s32 %s16, 2
        // Predicated region
        $region49: #{tpu_custom_call.1} parent=47 // pred_check
          %p442 = pneg %p113
        $region50: #{tpu_custom_call.1} parent=47 // pred_check_branch
          %444 = sbr.rel (%p442) target = $region52
        $region51: #{tpu_custom_call.1} parent=47 // pred_region
          %s445 = sand.u32 %s98, 1
          %s446 = scalar_lea.sflag [#allocation4], %s445
          %s447 = sand.u32 %s98, 1
          %s448 = smul.addr %s447, 16
          %s449 = scalar_lea.vmem [#allocation7], %s448
          %450 = dma.done %s446, 256
        $region52: #{tpu_custom_call.1} parent=47 // pred_fallthru
          _
      $region48: #{tpu_custom_call.1} parent=5 // pred_fallthru
        _
    $region6: #{tpu_custom_call.1} parent=1 // loop_footer
      %s20 = sadd.s32 1, %s16
    $region7: #{tpu_custom_call.1} parent=1 // loop_footer_branch
      %15 = sbr.rel target = $region3
    $region8: #{tpu_custom_call.1} parent=1 // loop_exit
      _
    %451 = vsyncpa [#allocation3], 1
    %s452 = scalar_lea.sflag [#allocation3], 1
    %453 = vsyncpa %s452, 1
    %454 = vsyncpa [#allocation6], 1
    %455 = vsyncpa [#allocation4], 1
    %s456 = scalar_lea.sflag [#allocation4], 1
    %457 = vsyncpa %s456, 1

</llo_original>
